<compile_context>
chip_gen: v7x
topology: tpu7x:2x2x1
jax: 0.10.0
libtpu: 0.0.40
codegen_flags: <defaults>
</compile_context>

<pallas_src>
import functools

import jax
import jax.numpy as jnp
from jax.experimental import pallas as pl
from jax.experimental.pallas import tpu as pltpu


def _fused_linear_sigmoid_kernel(x_ref, w_ref, b_ref, o_ref):
    """One batch tile of: sigmoid(x @ W + b).

    x:(TM, Dp)  W:(Dp, Lp)  b:(1, Lp)  o:(TM, Lp)
    """
    y = jnp.dot(x_ref[...], w_ref[...], preferred_element_type=jnp.float32)
    y = y + b_ref[...]                       # (1, Lp) broadcasts over sublanes
    o_ref[...] = jax.nn.sigmoid(y).astype(o_ref.dtype)


def _round_up(a, m):
    return ((a + m - 1) // m) * m


@functools.partial(jax.jit, static_argnames=("tm_max",))
def multilabel_classifier_forward(x, params, *, tm_max=512):
    """x: (N, D) float32.  params: dict of (in, out) weights + (1, out) biases."""
    N, D = x.shape
    L1 = params["w11"].shape[1]
    L2 = params["w22"].shape[1]
    L = L1 + L2

    # ---- fold branch 2 (linear2_1 -> linear2_2) into one affine map, f32 ----
    w2 = jnp.dot(params["w21"], params["w22"],
                 preferred_element_type=jnp.float32)                   # (D, L2)
    b2 = jnp.dot(params["b21"], params["w22"],
                 preferred_element_type=jnp.float32) + params["b22"]   # (1, L2)
    w = jnp.concatenate([params["w11"].astype(jnp.float32), w2], axis=1)  # (D, L)
    b = jnp.concatenate([params["b11"].astype(jnp.float32), b2], axis=1)  # (1, L)

    # ---- pad for clean TPU layouts -----------------------------------------
    L_pad = _round_up(L, 128)                 # lane-dense output stores
    D_pad = _round_up(D, 8)                   # sublane-aligned contraction dim
    TM = min(tm_max, _round_up(N, 8))         # batch tile (multiple of 8)
    N_pad = _round_up(N, TM)

    x_p = jnp.pad(x.astype(jnp.float32), ((0, N_pad - N), (0, D_pad - D)))
    w_p = jnp.pad(w, ((0, D_pad - D), (0, L_pad - L)))
    b_p = jnp.pad(b, ((0, 0), (0, L_pad - L)))

    grid = (N_pad // TM,)

    out = pl.pallas_call(
        _fused_linear_sigmoid_kernel,
        out_shape=jax.ShapeDtypeStruct((N_pad, L_pad), jnp.float32),
        grid_spec=pltpu.PrefetchScalarGridSpec(
            num_scalar_prefetch=0,
            grid=grid,
            in_specs=[
                pl.BlockSpec((TM, D_pad), lambda i: (i, 0)),     # x batch tile
                pl.BlockSpec((D_pad, L_pad), lambda i: (0, 0)),  # resident weight
                pl.BlockSpec((1, L_pad), lambda i: (0, 0)),      # resident bias
            ],
            out_specs=pl.BlockSpec((TM, L_pad), lambda i: (i, 0)),
        ),
        compiler_params=pltpu.CompilerParams(
            dimension_semantics=("parallel",),   # shard batch across TCs (v7x)
            vmem_limit_bytes=32 * 1024 * 1024,   # safe on v7x (64 MiB VMEM/TC)
        ),
    )(x_p, w_p, b_p)

    return out[:N, :L]


def _reference_forward(x, params):
    y1 = x @ params["w11"] + params["b11"]
    h = x @ params["w21"] + params["b21"]
    y2 = h @ params["w22"] + params["b22"]
    return jax.nn.sigmoid(jnp.concatenate([y1, y2], axis=1))


def make_params(key, D, L, H=10):
    """Synthetic init mirroring nn.Linear shapes, stored transposed (in, out)."""
    L1 = L // 2
    L2 = L - L1
    ks = jax.random.split(key, 6)
    scale = 0.1
    return {
        "w11": scale * jax.random.normal(ks[0], (D, L1), jnp.float32),
        "b11": scale * jax.random.normal(ks[1], (1, L1), jnp.float32),
        "w21": scale * jax.random.normal(ks[2], (D, H), jnp.float32),
        "b21": scale * jax.random.normal(ks[3], (1, H), jnp.float32),
        "w22": scale * jax.random.normal(ks[4], (H, L2), jnp.float32),
        "b22": scale * jax.random.normal(ks[5], (1, L2), jnp.float32),
    }


if __name__ == "__main__":
    # Small shapes consistent with the module: batch N, feature dim D,
    # total labels L (split L_1 + L_2), hidden H=10 (module default).
    N, D, L, H = 4, 32, 16, 10

    key = jax.random.PRNGKey(0)
    k_x, k_p = jax.random.split(key)
    x = jax.random.normal(k_x, (N, D), jnp.float32)
    params = make_params(k_p, D, L, H)

    y = multilabel_classifier_forward(x, params)
    y = jax.block_until_ready(y)

    y_ref = _reference_forward(x, params)
    assert y.shape == (N, L), y.shape
    assert bool(jnp.all(jnp.isfinite(y)))
    assert jnp.allclose(y, y_ref, atol=1e-5, rtol=1e-5), float(
        jnp.max(jnp.abs(y - y_ref)))

    print("KERNEL_OK")
</pallas_src>

<mosaic_0001>
module attributes {stable_mosaic.version = 11 : i64} {
  func.func @_fused_linear_sigmoid_kernel(%arg0: i32, %arg1: memref<8x32xf32, #tpu.memory_space<vmem>>, %arg2: memref<32x128xf32, #tpu.memory_space<vmem>>, %arg3: memref<1x128xf32, #tpu.memory_space<vmem>>, %arg4: memref<8x128xf32, #tpu.memory_space<vmem>>) attributes {dimension_semantics = [#tpu.dimension_semantics<parallel>], iteration_bounds = array<i64: 1>, scalar_prefetch = 0 : i64, scratch_operands = 0 : i64, tpu.core_type = #tpu.core_type<tc>, window_params = [{transform_indices = @transform_0, window_bounds = array<i64: 8, 32>}, {pipeline_mode = #tpu.pipeline_mode<synchronous>, transform_indices = @transform_1, window_bounds = array<i64: 32, 128>}, {pipeline_mode = #tpu.pipeline_mode<synchronous>, transform_indices = @transform_2, window_bounds = array<i64: 1, 128>}, {transform_indices = @transform_3, window_bounds = array<i64: 8, 128>}]} {
    %c0 = arith.constant 0 : index
    %c0_0 = arith.constant 0 : index
    %0 = vector.load %arg1[%c0, %c0_0] : memref<8x32xf32, #tpu.memory_space<vmem>>, vector<8x32xf32>
    %c0_1 = arith.constant 0 : index
    %c0_2 = arith.constant 0 : index
    %1 = vector.load %arg2[%c0_1, %c0_2] : memref<32x128xf32, #tpu.memory_space<vmem>>, vector<32x128xf32>
    %cst = arith.constant dense<0.000000e+00> : vector<8x128xf32>
    %2 = tpu.matmul %0, %1, %cst {dimension_numbers = #tpu.dot_dimension_numbers<[1], [0], [0], [1], [0, 0, 1, 1], [], []>} : vector<8x32xf32>, vector<32x128xf32>, vector<8x128xf32> -> vector<8x128xf32>
    %c0_3 = arith.constant 0 : index
    %c0_4 = arith.constant 0 : index
    %3 = vector.load %arg3[%c0_3, %c0_4] : memref<1x128xf32, #tpu.memory_space<vmem>>, vector<1x128xf32>
    %4 = vector.broadcast %3 : vector<1x128xf32> to vector<8x128xf32>
    %5 = arith.addf %2, %4 : vector<8x128xf32>
    %6 = arith.negf %5 : vector<8x128xf32>
    %7 = math.exp %6 : vector<8x128xf32>
    %cst_5 = arith.constant 1.000000e+00 : f32
    %8 = vector.broadcast %cst_5 : f32 to vector<8x128xf32>
    %9 = arith.addf %8, %7 : vector<8x128xf32>
    %10 = arith.divf %8, %9 : vector<8x128xf32>
    %c0_6 = arith.constant 0 : index
    %c0_7 = arith.constant 0 : index
    %11 = vector.load %arg4[%c0_6, %c0_7] : memref<8x128xf32, #tpu.memory_space<vmem>>, vector<8x128xf32>
    tpu.vector_store %arg4[%c0_6, %c0_7], %10 {strides = array<i32>} : memref<8x128xf32, #tpu.memory_space<vmem>>, vector<8x128xf32>,
    return
  }
  func.func @transform_0(%arg0: i32) -> (i32, i32) {
    %c0_i32 = arith.constant 0 : i32
    %c0_i32_0 = arith.constant 0 : i32
    return %arg0, %c0_i32 : i32, i32
  }
  func.func @transform_1(%arg0: i32) -> (i32, i32) {
    %c0_i32 = arith.constant 0 : i32
    %c0_i32_0 = arith.constant 0 : i32
    %c0_i32_1 = arith.constant 0 : i32
    return %c0_i32, %c0_i32_0 : i32, i32
  }
  func.func @transform_2(%arg0: i32) -> (i32, i32) {
    %c0_i32 = arith.constant 0 : i32
    %c0_i32_0 = arith.constant 0 : i32
    %c0_i32_1 = arith.constant 0 : i32
    return %c0_i32, %c0_i32_0 : i32, i32
  }
  func.func @transform_3(%arg0: i32) -> (i32, i32) {
    %c0_i32 = arith.constant 0 : i32
    %c0_i32_0 = arith.constant 0 : i32
    return %arg0, %c0_i32 : i32, i32
  }
}

</mosaic_0001>

<llo_original>
// kernel: multilabel_classifier_forward.1
$region0: #{multilabel_classifier_forward.1}
  #allocation0 [shape = 'u32[]', space=smem, size = 0x4, offset = 0x4, fixed_abs, tag = 'smem constant byte address 0x4 - core index']
  #allocation1 [shape = 'u32[144,128]{1,0:T(1,128)}', space=vmem, size = 0x12000, scoped, tag = 'internal scratch']
  %s0 = inlined_call_operand.vmem [shape: f32[8,32], index: 0, kind: input, shape index: {}]
  %s1 = inlined_call_operand.vmem [shape: f32[32,128], index: 1, kind: input, shape index: {}]
  %s2 = inlined_call_operand.vmem [shape: f32[1,128], index: 2, kind: input, shape index: {}]
  %s3 = inlined_call_operand.vmem [shape: f32[8,128], index: 3, kind: output, shape index: {}]
  %s4 = sld [smem:[#allocation0]]
  $region22: #{multilabel_classifier_forward.1} parent=0
    _
  %s6 = ssub.s32 1, %s4
  %s7 = scalar_select 0, %s6, %s4
  // Predicated region
  $region2: #{multilabel_classifier_forward.1} parent=0 // pred_check
    _
  $region3: #{multilabel_classifier_forward.1} parent=0 // pred_check_branch
    %9 = sbr.rel (0) target = $region5
  $region4: #{multilabel_classifier_forward.1} parent=0 // pred_region
    _
  $region5: #{multilabel_classifier_forward.1} parent=0 // pred_fallthru
    _
  // Predicated region
  $region6: #{multilabel_classifier_forward.1} parent=0 // pred_check
    _
  $region7: #{multilabel_classifier_forward.1} parent=0 // pred_check_branch
    %11 = sbr.rel (0) target = $region9
  $region8: #{multilabel_classifier_forward.1} parent=0 // pred_region
    _
  $region9: #{multilabel_classifier_forward.1} parent=0 // pred_fallthru
    _
  // Predicated region
  $region10: #{multilabel_classifier_forward.1} parent=0 // pred_check
    _
  $region11: #{multilabel_classifier_forward.1} parent=0 // pred_check_branch
    %13 = sbr.rel (0) target = $region13
  $region12: #{multilabel_classifier_forward.1} parent=0 // pred_region
    _
  $region13: #{multilabel_classifier_forward.1} parent=0 // pred_fallthru
    _
  %v14 = vld [vmem:[%s0] sm:$0xff]
  %v15 = vld [vmem:[%s1] sm:$0xff]
  %v16 = vld [vmem:[%s1 + $0x8] sm:$0xff]
  %v17 = vld [vmem:[%s1 + $0x10] sm:$0xff]
  %v18 = vld [vmem:[%s1 + $0x18] sm:$0xff]
  %v19 = vld [vmem:[%s2] sm:$0x1]
  %v21 = vlaneseq
  %v22 = vshrl.u32 %v21, 7
  %v23 = vsub.s32 0, %v22
  %v24 = vrot.slane %v19, %v23
  %vm26 = vcmask 261120
  %v28 = vsel %vm26, %v14, 0
  %30 = vmatprep.subr.mxu0 0.0
  %31 = vmatpush1.msra.mxu0 %v15
  %32 = vmatprep.subr.mxu0 0.0
  %33 = vmatpush1.msra.mxu0 %v16
  %34 = vmatprep.subr.mxu0 0.0
  %35 = vmatpush1.msra.mxu0 %v17
  %36 = vmatprep.subr.mxu0 0.0
  %37 = vmatpush1.msra.mxu0 %v18
  %38 = vmatprep.subr.mxu0 0.0
  %39 = vmatpush1.msra.mxu0 0.0
  %40 = vmatprep.subr.mxu0 0.0
  %41 = vmatpush1.msra.mxu0 0.0
  %42 = vmatprep.subr.mxu0 0.0
  %43 = vmatpush1.msra.mxu0 0.0
  %44 = vmatprep.subr.mxu0 0.0
  %45 = vmatpush1.msra.mxu0 0.0
  %46 = vmatprep.subr.mxu0 0.0
  %47 = vmatpush1.msra.mxu0 0.0
  %48 = vmatprep.subr.mxu0 0.0
  %49 = vmatpush1.msra.mxu0 0.0
  %50 = vmatprep.subr.mxu0 0.0
  %51 = vmatpush1.msra.mxu0 0.0
  %52 = vmatprep.subr.mxu0 0.0
  %53 = vmatpush1.msra.mxu0 0.0
  %54 = vmatprep.subr.mxu0 0.0
  %55 = vmatpush1.msra.mxu0 0.0
  %56 = vmatprep.subr.mxu0 0.0
  %57 = vmatpush1.msra.mxu0 0.0
  %58 = vmatprep.subr.mxu0 0.0
  %59 = vmatpush1.msra.mxu0 0.0
  %60 = vmatprep.subr.mxu0 0.0
  %61 = vmatpush1.msra.mxu0 0.0
  %62 = vmatprep.subr.mxu0 0.0
  %63 = vmatpush1.msra.mxu0 0.0
  %64 = vmatprep.subr.mxu0 0.0
  %65 = vmatpush1.msra.mxu0 0.0
  %66 = vmatprep.subr.mxu0 0.0
  %67 = vmatpush1.msra.mxu0 0.0
  %68 = vmatprep.subr.mxu0 0.0
  %69 = vmatpush1.msra.mxu0 0.0
  %70 = vmatprep.subr.mxu0 0.0
  %71 = vmatpush1.msra.mxu0 0.0
  %72 = vmatprep.subr.mxu0 0.0
  %73 = vmatpush1.msra.mxu0 0.0
  %74 = vmatprep.subr.mxu0 0.0
  %75 = vmatpush1.msra.mxu0 0.0
  %76 = vmatprep.subr.mxu0 0.0
  %77 = vmatpush1.msra.mxu0 0.0
  %78 = vmatprep.subr.mxu0 0.0
  %79 = vmatpush1.msra.mxu0 0.0
  %80 = vmatprep.subr.mxu0 0.0
  %81 = vmatpush1.msra.mxu0 0.0
  %82 = vmatprep.subr.mxu0 0.0
  %83 = vmatpush1.msra.mxu0 0.0
  %84 = vmatprep.subr.mxu0 0.0
  %85 = vmatpush1.msra.mxu0 0.0
  %86 = vmatprep.subr.mxu0 0.0
  %87 = vmatpush1.msra.mxu0 0.0
  %88 = vmatprep.subr.mxu0 0.0
  %89 = vmatpush1.msra.mxu0 0.0
  %90 = vmatprep.subr.mxu0 0.0
  %91 = vmatpush1.msra.mxu0 0.0
  %92 = vmatprep.subr.mxu0 0.0
  %93 = vmatpush1.msra.mxu0 0.0
  %94 = vmatprep.mubr.f32.mxu0 0.0
  %95 = vmatmul.mubr.f32.gmra.mrb[0].mxu0 %v28
  %v96 = vpop.f32.mrb[0].mxu0
  %v97 = vadd.f32 %v24, %v96
  %v98 = vpop.f32.mrb[0].mxu0
  %99 = vdwg.mxu0
  %v100 = vxor.u32 %v97, 2147483648
  %v101 = vmul.f32 %v100, 1.442695
  %v102 = vpow.pop %v101
  %v103 = vadd.f32 %v102, 1.0
  %v104 = vrcp.pop %v103
  %v105 = vmul.f32 1.0, %v104
  %106 = vst [vmem:[%s3] sm:$0xff] %v105
  // Predicated region
  $region14: #{multilabel_classifier_forward.1} parent=0 // pred_check
    _
  $region15: #{multilabel_classifier_forward.1} parent=0 // pred_check_branch
    %108 = sbr.rel (0) target = $region17
  $region16: #{multilabel_classifier_forward.1} parent=0 // pred_region
    _
  $region17: #{multilabel_classifier_forward.1} parent=0 // pred_fallthru
    _
  // Predicated region
  $region18: #{multilabel_classifier_forward.1} parent=0 // pred_check
    _
  $region19: #{multilabel_classifier_forward.1} parent=0 // pred_check_branch
    %110 = sbr.rel (0) target = $region21
  $region20: #{multilabel_classifier_forward.1} parent=0 // pred_region
    _
  $region21: #{multilabel_classifier_forward.1} parent=0 // pred_fallthru
    _

</llo_original>
